<compile_context>
chip_gen: v7x
topology: tpu7x:2x2x1
jax: 0.10.0
libtpu: 0.0.40
codegen_flags: <defaults>
</compile_context>

<pallas_src>
import jax
import jax.numpy as jnp
from jax.experimental import pallas as pl
from jax.experimental.pallas import tpu as pltpu

D = 20  # feature size of FixedHiddenMLP


def fixed_hidden_mlp_kernel(x_ref, params_ref, o_ref):
    x = x_ref[...]                       # (B, 20) f32
    wlT = params_ref[0, 0:D, :]          # (20, 20) torch Linear weight, pre-transposed
    b = params_ref[0, D:D + 1, :]        # (1, 20) bias, packed into sublane padding
    wr = params_ref[1, 0:D, :]           # (20, 20) fixed random weight

    # X = self.linear(X)
    h = jnp.dot(x, wlT, preferred_element_type=jnp.float32) + b
    # X = relu(X @ rand_weight + 1)
    h = jnp.maximum(jnp.dot(h, wr, preferred_element_type=jnp.float32) + 1.0, 0.0)
    # X = self.linear(X)   (same shared Linear layer)
    h = jnp.dot(h, wlT, preferred_element_type=jnp.float32) + b

    # while X.abs().sum() > 1: X /= 2
    # Closed form: n = max(0, ceil(log2(s))) halvings, computed exactly from the
    # fp32 bit pattern (no log2/ceil rounding risk at exact powers of two).
    # Division by 2 is exact in fp32 (no subnormals reachable here), so
    # sum(h / 2**n) == sum(h) * 2**-n.
    s = jnp.sum(jnp.abs(h), keepdims=True)                # (1, 1) f32, s >= 0
    bits = pltpu.bitcast(s, jnp.int32)                    # (1, 1) i32
    exp = ((bits >> 23) & 0xFF) - 127                     # unbiased exponent
    mant = bits & 0x7FFFFF
    n = exp + jnp.where(mant != 0, 1, 0)                  # ceil(log2(s)) for normal s > 0
    n = jnp.clip(n, 0, 126)                               # s <= 1 (or s == 0) -> n = 0
    scale = pltpu.bitcast((127 - n) << 23, jnp.float32)   # exactly 2**-n

    # return X.sum(): single (1,1) VMEM store is the whole epilogue.
    o_ref[...] = jnp.sum(h, keepdims=True) * scale        # (1, 1) f32


def pack_params(w_lin, b_lin, w_rand):
    """Run ONCE at module init (outside the per-forward path).

    slab[0, 0:20, :] = W.T          (transpose done once here, not on the XLU)
    slab[0, 20,   :] = bias         (lives in the sublane padding of slice 0)
    slab[1, 0:20, :] = rand_weight
    """
    slab = jnp.zeros((2, 24, D), jnp.float32)
    slab = slab.at[0, :D, :].set(w_lin.T.astype(jnp.float32))
    slab = slab.at[0, D, :].set(b_lin.astype(jnp.float32))
    slab = slab.at[1, :D, :].set(w_rand.astype(jnp.float32))
    return slab


@jax.jit
def fixed_hidden_mlp(x, params):
    """x: (B, 20) f32; params: (2, 24, 20) slab from pack_params(). Scalar out."""
    out = pl.pallas_call(
        fixed_hidden_mlp_kernel,
        out_shape=jax.ShapeDtypeStruct((1, 1), jnp.float32),
        # Gridless: whole arrays as single VMEM blocks; no grid-loop machinery,
        # no double buffering (trip count is 1).
        in_specs=[
            pl.BlockSpec(memory_space=pltpu.MemorySpace.VMEM),
            pl.BlockSpec(memory_space=pltpu.MemorySpace.VMEM),
        ],
        out_specs=pl.BlockSpec(memory_space=pltpu.MemorySpace.VMEM),
    )(x, params)
    return out[0, 0]


def reference(x, w_lin, b_lin, w_rand):
    # Pure-JAX reference mirroring the PyTorch forward exactly.
    h = x @ w_lin.T + b_lin
    h = jnp.maximum(h @ w_rand + 1.0, 0.0)
    h = h @ w_lin.T + b_lin
    while float(jnp.sum(jnp.abs(h))) > 1.0:
        h = h / 2.0
    return jnp.sum(h)


if __name__ == "__main__":
    key = jax.random.PRNGKey(0)
    k_x, k_rw, k_w, k_b = jax.random.split(key, 4)

    batch = 2
    # X = torch.rand(2, 20)                      -> uniform [0, 1)
    x = jax.random.uniform(k_x, (batch, D), dtype=jnp.float32)
    # self.rand_weight = torch.rand((20, 20))    -> uniform [0, 1)
    w_rand = jax.random.uniform(k_rw, (D, D), dtype=jnp.float32)
    # nn.Linear(20, 20): weight/bias ~ U(-1/sqrt(20), 1/sqrt(20))
    bound = 1.0 / (D ** 0.5)
    w_lin = jax.random.uniform(k_w, (D, D), minval=-bound, maxval=bound,
                               dtype=jnp.float32)
    b_lin = jax.random.uniform(k_b, (D,), minval=-bound, maxval=bound,
                               dtype=jnp.float32)

    # Module-init-time packing: one-off, NOT part of the per-forward graph.
    params = jax.block_until_ready(pack_params(w_lin, b_lin, w_rand))

    out = fixed_hidden_mlp(x, params)
    out = jax.block_until_ready(out)

    ref = reference(x, w_lin, b_lin, w_rand)
    assert jnp.allclose(out, ref, rtol=1e-5, atol=1e-6), (out, ref)

    print("KERNEL_OK")
</pallas_src>

<mosaic_0001>
module attributes {stable_mosaic.version = 11 : i64} {
  func.func @fixed_hidden_mlp_kernel(%arg0: memref<2x20xf32, #tpu.memory_space<vmem>>, %arg1: memref<2x24x20xf32, #tpu.memory_space<vmem>>, %arg2: memref<1x1xf32, #tpu.memory_space<vmem>>) attributes {dimension_semantics = [], scalar_prefetch = 0 : i64, scratch_operands = 0 : i64, tpu.core_type = #tpu.core_type<tc>} {
    %c0 = arith.constant 0 : index
    %c0_0 = arith.constant 0 : index
    %0 = vector.load %arg0[%c0, %c0_0] : memref<2x20xf32, #tpu.memory_space<vmem>>, vector<2x20xf32>
    %c0_1 = arith.constant 0 : index
    %c0_2 = arith.constant 0 : index
    %c0_3 = arith.constant 0 : index
    %1 = vector.load %arg1[%c0_1, %c0_2, %c0_3] : memref<2x24x20xf32, #tpu.memory_space<vmem>>, vector<1x20x20xf32>
    %2 = vector.shape_cast %1 : vector<1x20x20xf32> to vector<20x20xf32>
    %c0_4 = arith.constant 0 : index
    %c20 = arith.constant 20 : index
    %c0_5 = arith.constant 0 : index
    %3 = vector.load %arg1[%c0_4, %c20, %c0_5] : memref<2x24x20xf32, #tpu.memory_space<vmem>>, vector<1x1x20xf32>
    %4 = vector.shape_cast %3 : vector<1x1x20xf32> to vector<1x20xf32>
    %c1 = arith.constant 1 : index
    %c0_6 = arith.constant 0 : index
    %c0_7 = arith.constant 0 : index
    %5 = vector.load %arg1[%c1, %c0_6, %c0_7] : memref<2x24x20xf32, #tpu.memory_space<vmem>>, vector<1x20x20xf32>
    %6 = vector.shape_cast %5 : vector<1x20x20xf32> to vector<20x20xf32>
    %cst = arith.constant dense<0.000000e+00> : vector<2x20xf32>
    %7 = tpu.matmul %0, %2, %cst {dimension_numbers = #tpu.dot_dimension_numbers<[1], [0], [0], [1], [0, 0, 1, 1], [], []>} : vector<2x20xf32>, vector<20x20xf32>, vector<2x20xf32> -> vector<2x20xf32>
    %8 = vector.broadcast %4 : vector<1x20xf32> to vector<2x20xf32>
    %9 = arith.addf %7, %8 : vector<2x20xf32>
    %cst_8 = arith.constant dense<0.000000e+00> : vector<2x20xf32>
    %10 = tpu.matmul %9, %6, %cst_8 {dimension_numbers = #tpu.dot_dimension_numbers<[1], [0], [0], [1], [0, 0, 1, 1], [], []>} : vector<2x20xf32>, vector<20x20xf32>, vector<2x20xf32> -> vector<2x20xf32>
    %cst_9 = arith.constant 1.000000e+00 : f32
    %11 = vector.broadcast %cst_9 : f32 to vector<2x20xf32>
    %12 = arith.addf %10, %11 : vector<2x20xf32>
    %cst_10 = arith.constant 0.000000e+00 : f32
    %13 = vector.broadcast %cst_10 : f32 to vector<2x20xf32>
    %14 = arith.maximumf %12, %13 : vector<2x20xf32>
    %cst_11 = arith.constant dense<0.000000e+00> : vector<2x20xf32>
    %15 = tpu.matmul %14, %2, %cst_11 {dimension_numbers = #tpu.dot_dimension_numbers<[1], [0], [0], [1], [0, 0, 1, 1], [], []>} : vector<2x20xf32>, vector<20x20xf32>, vector<2x20xf32> -> vector<2x20xf32>
    %16 = vector.broadcast %4 : vector<1x20xf32> to vector<2x20xf32>
    %17 = arith.addf %15, %16 : vector<2x20xf32>
    %18 = math.absf %17 : vector<2x20xf32>
    %19 = vector.shape_cast %18 : vector<2x20xf32> to vector<1x2x20xf32>
    %cst_12 = arith.constant dense<0.000000e+00> : vector<1xf32>
    %20 = vector.multi_reduction <add>, %19, %cst_12 [1, 2] : vector<1x2x20xf32> to vector<1xf32>
    %21 = vector.shape_cast %20 : vector<1xf32> to vector<1x1x1xf32>
    %22 = vector.extract %21[0, 0, 0] : f32 from vector<1x1x1xf32>
    %23 = vector.broadcast %22 : f32 to vector<1x1xf32>
    %24 = tpu.bitcast %23 : vector<1x1xf32> -> vector<1x1xi32>
    %c23_i32 = arith.constant 23 : i32
    %25 = vector.broadcast %c23_i32 : i32 to vector<1x1xi32>
    %26 = arith.shrsi %24, %25 : vector<1x1xi32>
    %c255_i32 = arith.constant 255 : i32
    %27 = vector.broadcast %c255_i32 : i32 to vector<1x1xi32>
    %28 = arith.andi %26, %27 : vector<1x1xi32>
    %c127_i32 = arith.constant 127 : i32
    %29 = vector.broadcast %c127_i32 : i32 to vector<1x1xi32>
    %30 = arith.subi %28, %29 : vector<1x1xi32>
    %c8388607_i32 = arith.constant 8388607 : i32
    %31 = vector.broadcast %c8388607_i32 : i32 to vector<1x1xi32>
    %32 = arith.andi %24, %31 : vector<1x1xi32>
    %c0_i32 = arith.constant 0 : i32
    %33 = vector.broadcast %c0_i32 : i32 to vector<1x1xi32>
    %34 = arith.cmpi ne, %32, %33 : vector<1x1xi32>
    %c1_i32 = arith.constant 1 : i32
    %c0_i32_13 = arith.constant 0 : i32
    %35 = vector.broadcast %c1_i32 : i32 to vector<1x1xi32>
    %36 = vector.broadcast %c0_i32_13 : i32 to vector<1x1xi32>
    %37 = arith.select %34, %35, %36 : vector<1x1xi1>, vector<1x1xi32>
    %38 = arith.addi %30, %37 : vector<1x1xi32>
    %c0_i32_14 = arith.constant 0 : i32
    %c126_i32 = arith.constant 126 : i32
    %39 = vector.broadcast %c0_i32_14 : i32 to vector<1x1xi32>
    %40 = arith.maxsi %39, %38 : vector<1x1xi32>
    %41 = vector.broadcast %c126_i32 : i32 to vector<1x1xi32>
    %42 = arith.minsi %41, %40 : vector<1x1xi32>
    %c127_i32_15 = arith.constant 127 : i32
    %43 = vector.broadcast %c127_i32_15 : i32 to vector<1x1xi32>
    %44 = arith.subi %43, %42 : vector<1x1xi32>
    %c23_i32_16 = arith.constant 23 : i32
    %45 = vector.broadcast %c23_i32_16 : i32 to vector<1x1xi32>
    %46 = arith.shli %44, %45 : vector<1x1xi32>
    %47 = tpu.bitcast %46 : vector<1x1xi32> -> vector<1x1xf32>
    %48 = vector.shape_cast %17 : vector<2x20xf32> to vector<1x2x20xf32>
    %cst_17 = arith.constant dense<0.000000e+00> : vector<1xf32>
    %49 = vector.multi_reduction <add>, %48, %cst_17 [1, 2] : vector<1x2x20xf32> to vector<1xf32>
    %50 = vector.shape_cast %49 : vector<1xf32> to vector<1x1x1xf32>
    %51 = vector.extract %50[0, 0, 0] : f32 from vector<1x1x1xf32>
    %52 = vector.broadcast %51 : f32 to vector<1x1xf32>
    %53 = arith.mulf %52, %47 : vector<1x1xf32>
    %c0_18 = arith.constant 0 : index
    %c0_19 = arith.constant 0 : index
    %54 = vector.load %arg2[%c0_18, %c0_19] : memref<1x1xf32, #tpu.memory_space<vmem>>, vector<1x1xf32>
    tpu.vector_store %arg2[%c0_18, %c0_19], %53 {strides = array<i32>} : memref<1x1xf32, #tpu.memory_space<vmem>>, vector<1x1xf32>,
    return
  }
}

</mosaic_0001>

<llo_original>
// kernel: fixed_hidden_mlp.1
$region0: #{fixed_hidden_mlp.1}
  #allocation0 [shape = 'u32[]', space=smem, size = 0x4, offset = 0x4, fixed_abs, tag = 'smem constant byte address 0x4 - core index']
  #allocation1 [shape = 'u32[144,128]{1,0:T(1,128)}', space=vmem, size = 0x12000, scoped, tag = 'internal scratch']
  %s0 = inlined_call_operand.vmem [shape: f32[2,20], index: 0, kind: input, shape index: {}]
  %s1 = inlined_call_operand.vmem [shape: f32[2,24,20], index: 1, kind: input, shape index: {}]
  %s2 = inlined_call_operand.hbm [shape: f32[1,1], index: 2, kind: output, shape index: {}]
  %s3 = sld [smem:[#allocation0]]
  $region18: #{fixed_hidden_mlp.1} parent=0
    _
  %s5 = ssub.s32 1, %s3
  %s6 = scalar_select 0, %s5, %s3
  $region1: #{fixed_hidden_mlp.1} parent=0
    #allocation2 [shape = 'u8[512]{0}', space=vmem, size = 0x400, scoped, tag = 'output window, operand 0, single buffered']
    #allocation3 [shape = 's32[1]{0}', space=sflag, size = 0x4, scoped, tag = 'scoped memory for fixed_hidden_mlp.1']
    %7 = vsyncpa [#allocation3], 0
    // Predicated region
    $region2: #{fixed_hidden_mlp.1} parent=1 // pred_check
      _
    $region3: #{fixed_hidden_mlp.1} parent=1 // pred_check_branch
      %9 = sbr.rel (0) target = $region5
    $region4: #{fixed_hidden_mlp.1} parent=1 // pred_region
      _
    $region5: #{fixed_hidden_mlp.1} parent=1 // pred_fallthru
      _
    // Predicated region
    $region6: #{fixed_hidden_mlp.1} parent=1 // pred_check
      _
    $region7: #{fixed_hidden_mlp.1} parent=1 // pred_check_branch
      %11 = sbr.rel (0) target = $region9
    $region8: #{fixed_hidden_mlp.1} parent=1 // pred_region
      _
    $region9: #{fixed_hidden_mlp.1} parent=1 // pred_fallthru
      _
    %v12 = vld [vmem:[%s0] sm:$0x3]
    %v13 = vld [vmem:[%s1] sm:$0xff]
    %v14 = vld [vmem:[%s1 + $0x8] sm:$0xff]
    %v15 = vld [vmem:[%s1 + $0x10] sm:$0xf]
    %v16 = vld [vmem:[%s1 + $0x14] sm:$0x1]
    %s17 = scalar_lea.vmem %s1, 24
    %v18 = vld [vmem:[%s17] sm:$0xff]
    %v19 = vld [vmem:[%s17 + $0x8] sm:$0xff]
    %v20 = vld [vmem:[%s17 + $0x10] sm:$0xf]
    %v21 = vlaneseq
    %v22 = vshrl.u32 %v21, 7
    %v23 = vsub.s32 0, %v22
    %v24 = vrot.slane %v16, %v23
    %vm25 = vcmask 162816
    %v27 = vsel %vm25, %v12, 0
    %vm29 = vcmask 1043456
    %v31 = vsel %vm29, %v15, 0
    %33 = vmatprep.subr.mxu0 0.0
    %34 = vmatpush1.msra.mxu0 %v13
    %35 = vmatprep.subr.mxu0 0.0
    %36 = vmatpush1.msra.mxu0 %v14
    %37 = vmatprep.subr.mxu0 0.0
    %38 = vmatpush1.msra.mxu0 %v31
    %39 = vmatprep.subr.mxu0 0.0
    %40 = vmatpush1.msra.mxu0 0.0
    %41 = vmatprep.subr.mxu0 0.0
    %42 = vmatpush1.msra.mxu0 0.0
    %43 = vmatprep.subr.mxu0 0.0
    %44 = vmatpush1.msra.mxu0 0.0
    %45 = vmatprep.subr.mxu0 0.0
    %46 = vmatpush1.msra.mxu0 0.0
    %47 = vmatprep.subr.mxu0 0.0
    %48 = vmatpush1.msra.mxu0 0.0
    %49 = vmatprep.subr.mxu0 0.0
    %50 = vmatpush1.msra.mxu0 0.0
    %51 = vmatprep.subr.mxu0 0.0
    %52 = vmatpush1.msra.mxu0 0.0
    %53 = vmatprep.subr.mxu0 0.0
    %54 = vmatpush1.msra.mxu0 0.0
    %55 = vmatprep.subr.mxu0 0.0
    %56 = vmatpush1.msra.mxu0 0.0
    %57 = vmatprep.subr.mxu0 0.0
    %58 = vmatpush1.msra.mxu0 0.0
    %59 = vmatprep.subr.mxu0 0.0
    %60 = vmatpush1.msra.mxu0 0.0
    %61 = vmatprep.subr.mxu0 0.0
    %62 = vmatpush1.msra.mxu0 0.0
    %63 = vmatprep.subr.mxu0 0.0
    %64 = vmatpush1.msra.mxu0 0.0
    %65 = vmatprep.subr.mxu0 0.0
    %66 = vmatpush1.msra.mxu0 0.0
    %67 = vmatprep.subr.mxu0 0.0
    %68 = vmatpush1.msra.mxu0 0.0
    %69 = vmatprep.subr.mxu0 0.0
    %70 = vmatpush1.msra.mxu0 0.0
    %71 = vmatprep.subr.mxu0 0.0
    %72 = vmatpush1.msra.mxu0 0.0
    %73 = vmatprep.subr.mxu0 0.0
    %74 = vmatpush1.msra.mxu0 0.0
    %75 = vmatprep.subr.mxu0 0.0
    %76 = vmatpush1.msra.mxu0 0.0
    %77 = vmatprep.subr.mxu0 0.0
    %78 = vmatpush1.msra.mxu0 0.0
    %79 = vmatprep.subr.mxu0 0.0
    %80 = vmatpush1.msra.mxu0 0.0
    %81 = vmatprep.subr.mxu0 0.0
    %82 = vmatpush1.msra.mxu0 0.0
    %83 = vmatprep.subr.mxu0 0.0
    %84 = vmatpush1.msra.mxu0 0.0
    %85 = vmatprep.subr.mxu0 0.0
    %86 = vmatpush1.msra.mxu0 0.0
    %87 = vmatprep.subr.mxu0 0.0
    %88 = vmatpush1.msra.mxu0 0.0
    %89 = vmatprep.subr.mxu0 0.0
    %90 = vmatpush1.msra.mxu0 0.0
    %91 = vmatprep.subr.mxu0 0.0
    %92 = vmatpush1.msra.mxu0 0.0
    %93 = vmatprep.subr.mxu0 0.0
    %94 = vmatpush1.msra.mxu0 0.0
    %95 = vmatprep.subr.mxu0 0.0
    %96 = vmatpush1.msra.mxu0 0.0
    %97 = vmatprep.mubr.f32.mxu0 0.0
    %98 = vmatmul.mubr.f32.gmra.mrb[0].mxu0 %v27
    %v99 = vpop.f32.mrb[0].mxu0
    %v100 = vadd.f32 %v24, %v99
    %v101 = vpop.f32.mrb[0].mxu0
    %102 = vdwg.mxu0
    %v104 = vsel %vm25, %v100, 0
    %v107 = vsel %vm29, %v20, 0
    %109 = vmatprep.subr.mxu0 0.0
    %110 = vmatpush1.msra.mxu0 %v18
    %111 = vmatprep.subr.mxu0 0.0
    %112 = vmatpush1.msra.mxu0 %v19
    %113 = vmatprep.subr.mxu0 0.0
    %114 = vmatpush1.msra.mxu0 %v107
    %115 = vmatprep.subr.mxu0 0.0
    %116 = vmatpush1.msra.mxu0 0.0
    %117 = vmatprep.subr.mxu0 0.0
    %118 = vmatpush1.msra.mxu0 0.0
    %119 = vmatprep.subr.mxu0 0.0
    %120 = vmatpush1.msra.mxu0 0.0
    %121 = vmatprep.subr.mxu0 0.0
    %122 = vmatpush1.msra.mxu0 0.0
    %123 = vmatprep.subr.mxu0 0.0
    %124 = vmatpush1.msra.mxu0 0.0
    %125 = vmatprep.subr.mxu0 0.0
    %126 = vmatpush1.msra.mxu0 0.0
    %127 = vmatprep.subr.mxu0 0.0
    %128 = vmatpush1.msra.mxu0 0.0
    %129 = vmatprep.subr.mxu0 0.0
    %130 = vmatpush1.msra.mxu0 0.0
    %131 = vmatprep.subr.mxu0 0.0
    %132 = vmatpush1.msra.mxu0 0.0
    %133 = vmatprep.subr.mxu0 0.0
    %134 = vmatpush1.msra.mxu0 0.0
    %135 = vmatprep.subr.mxu0 0.0
    %136 = vmatpush1.msra.mxu0 0.0
    %137 = vmatprep.subr.mxu0 0.0
    %138 = vmatpush1.msra.mxu0 0.0
    %139 = vmatprep.subr.mxu0 0.0
    %140 = vmatpush1.msra.mxu0 0.0
    %141 = vmatprep.subr.mxu0 0.0
    %142 = vmatpush1.msra.mxu0 0.0
    %143 = vmatprep.subr.mxu0 0.0
    %144 = vmatpush1.msra.mxu0 0.0
    %145 = vmatprep.subr.mxu0 0.0
    %146 = vmatpush1.msra.mxu0 0.0
    %147 = vmatprep.subr.mxu0 0.0
    %148 = vmatpush1.msra.mxu0 0.0
    %149 = vmatprep.subr.mxu0 0.0
    %150 = vmatpush1.msra.mxu0 0.0
    %151 = vmatprep.subr.mxu0 0.0
    %152 = vmatpush1.msra.mxu0 0.0
    %153 = vmatprep.subr.mxu0 0.0
    %154 = vmatpush1.msra.mxu0 0.0
    %155 = vmatprep.subr.mxu0 0.0
    %156 = vmatpush1.msra.mxu0 0.0
    %157 = vmatprep.subr.mxu0 0.0
    %158 = vmatpush1.msra.mxu0 0.0
    %159 = vmatprep.subr.mxu0 0.0
    %160 = vmatpush1.msra.mxu0 0.0
    %161 = vmatprep.subr.mxu0 0.0
    %162 = vmatpush1.msra.mxu0 0.0
    %163 = vmatprep.subr.mxu0 0.0
    %164 = vmatpush1.msra.mxu0 0.0
    %165 = vmatprep.subr.mxu0 0.0
    %166 = vmatpush1.msra.mxu0 0.0
    %167 = vmatprep.subr.mxu0 0.0
    %168 = vmatpush1.msra.mxu0 0.0
    %169 = vmatprep.subr.mxu0 0.0
    %170 = vmatpush1.msra.mxu0 0.0
    %171 = vmatprep.subr.mxu0 0.0
    %172 = vmatpush1.msra.mxu0 0.0
    %173 = vmatprep.mubr.f32.mxu0 0.0
    %174 = vmatmul.mubr.f32.gmra.mrb[0].mxu0 %v104
    %v175 = vpop.f32.mrb[0].mxu0
    %v176 = vadd.f32 1.0, %v175
    %v177 = vpop.f32.mrb[0].mxu0
    %178 = vdwg.mxu0
    %v179 = vmax.f32 %v176, 0.0
    %v181 = vsel %vm25, %v179, 0
    %183 = vmatprep.subr.mxu0 0.0
    %184 = vmatpush1.msra.mxu0 %v13
    %185 = vmatprep.subr.mxu0 0.0
    %186 = vmatpush1.msra.mxu0 %v14
    %187 = vmatprep.subr.mxu0 0.0
    %188 = vmatpush1.msra.mxu0 %v31
    %189 = vmatprep.subr.mxu0 0.0
    %190 = vmatpush1.msra.mxu0 0.0
    %191 = vmatprep.subr.mxu0 0.0
    %192 = vmatpush1.msra.mxu0 0.0
    %193 = vmatprep.subr.mxu0 0.0
    %194 = vmatpush1.msra.mxu0 0.0
    %195 = vmatprep.subr.mxu0 0.0
    %196 = vmatpush1.msra.mxu0 0.0
    %197 = vmatprep.subr.mxu0 0.0
    %198 = vmatpush1.msra.mxu0 0.0
    %199 = vmatprep.subr.mxu0 0.0
    %200 = vmatpush1.msra.mxu0 0.0
    %201 = vmatprep.subr.mxu0 0.0
    %202 = vmatpush1.msra.mxu0 0.0
    %203 = vmatprep.subr.mxu0 0.0
    %204 = vmatpush1.msra.mxu0 0.0
    %205 = vmatprep.subr.mxu0 0.0
    %206 = vmatpush1.msra.mxu0 0.0
    %207 = vmatprep.subr.mxu0 0.0
    %208 = vmatpush1.msra.mxu0 0.0
    %209 = vmatprep.subr.mxu0 0.0
    %210 = vmatpush1.msra.mxu0 0.0
    %211 = vmatprep.subr.mxu0 0.0
    %212 = vmatpush1.msra.mxu0 0.0
    %213 = vmatprep.subr.mxu0 0.0
    %214 = vmatpush1.msra.mxu0 0.0
    %215 = vmatprep.subr.mxu0 0.0
    %216 = vmatpush1.msra.mxu0 0.0
    %217 = vmatprep.subr.mxu0 0.0
    %218 = vmatpush1.msra.mxu0 0.0
    %219 = vmatprep.subr.mxu0 0.0
    %220 = vmatpush1.msra.mxu0 0.0
    %221 = vmatprep.subr.mxu0 0.0
    %222 = vmatpush1.msra.mxu0 0.0
    %223 = vmatprep.subr.mxu0 0.0
    %224 = vmatpush1.msra.mxu0 0.0
    %225 = vmatprep.subr.mxu0 0.0
    %226 = vmatpush1.msra.mxu0 0.0
    %227 = vmatprep.subr.mxu0 0.0
    %228 = vmatpush1.msra.mxu0 0.0
    %229 = vmatprep.subr.mxu0 0.0
    %230 = vmatpush1.msra.mxu0 0.0
    %231 = vmatprep.subr.mxu0 0.0
    %232 = vmatpush1.msra.mxu0 0.0
    %233 = vmatprep.subr.mxu0 0.0
    %234 = vmatpush1.msra.mxu0 0.0
    %235 = vmatprep.subr.mxu0 0.0
    %236 = vmatpush1.msra.mxu0 0.0
    %237 = vmatprep.subr.mxu0 0.0
    %238 = vmatpush1.msra.mxu0 0.0
    %239 = vmatprep.subr.mxu0 0.0
    %240 = vmatpush1.msra.mxu0 0.0
    %241 = vmatprep.subr.mxu0 0.0
    %242 = vmatpush1.msra.mxu0 0.0
    %243 = vmatprep.subr.mxu0 0.0
    %244 = vmatpush1.msra.mxu0 0.0
    %245 = vmatprep.subr.mxu0 0.0
    %246 = vmatpush1.msra.mxu0 0.0
    %247 = vmatprep.mubr.f32.mxu0 0.0
    %248 = vmatmul.mubr.f32.gmra.mrb[0].mxu0 %v181
    %v249 = vpop.f32.mrb[0].mxu0
    %v250 = vadd.f32 %v24, %v249
    %v251 = vpop.f32.mrb[0].mxu0
    %252 = vdwg.mxu0
    %v253 = vand.u32 2147483647, %v250
    %vm254 = vcmask 156672
    %v255 = vsel %vm254, %v253, 0.0
    %256 = vadd.xlane.f32.xlu0 %v255
    %v257 = vpop.xlane.xlu0 %256
    %v258 = vrot.slane %v257, 4
    %v259 = vadd.f32 %v257, %v258
    %v260 = vrot.slane %v259, 2
    %v261 = vadd.f32 %v259, %v260
    %v262 = vrot.slane %v261, 1
    %v263 = vadd.f32 %v261, %v262
    %s264 = vtos %v263
    %v265 = vstv %s264
    %v267 = vshra.s32 %v265, 23
    %v268 = vand.u32 %v267, 255
    %v269 = vsub.s32 %v268, 127
    %v270 = vand.u32 %v265, 8388607
    %vm271 = vcmp.ne.s32.totalorder %v270, 0
    %v272 = vsel %vm271, 1, 0
    %v273 = vadd.s32 %v269, %v272
    %vm274 = vcmp.gt.s32.totalorder %v273, 0
    %v275 = vsel %vm274, %v273, 0
    %vm276 = vcmp.lt.s32.totalorder %v275, 126
    %v277 = vsel %vm276, %v275, 126
    %v278 = vsub.s32 127, %v277
    %v279 = vshll.u32 %v278, 23
    %v281 = vsel %vm254, %v250, 0.0
    %282 = vadd.xlane.f32.xlu0 %v281
    %v283 = vpop.xlane.xlu0 %282
    %v284 = vrot.slane %v283, 4
    %v285 = vadd.f32 %v283, %v284
    %v286 = vrot.slane %v285, 2
    %v287 = vadd.f32 %v285, %v286
    %v288 = vrot.slane %v287, 1
    %v289 = vadd.f32 %v287, %v288
    %s290 = vtos %v289
    %v291 = vstv %s290
    %v292 = vmul.f32 %v291, %v279
    %vm293 = vcmask 0
    %294 = vst.msk [vmem:[#allocation2] sm:$0x1] %vm293, %v292
    // Predicated region
    $region10: #{fixed_hidden_mlp.1} parent=1 // pred_check
      _
    $region11: #{fixed_hidden_mlp.1} parent=1 // pred_check_branch
      %296 = sbr.rel (0) target = $region13
    $region12: #{fixed_hidden_mlp.1} parent=1 // pred_region
      %s298 = ssub.s32 16, 16
      %299 = vsyncadd [#allocation3], %s298
      %s301 = sshll.u32 [#allocation2], 4
      %s302 = int_to_ptr.vmem [resolvable:$true] %s301
      %304 = dma.vmem_to_hbm [thread:$0]  %s302, 16, %s2, [#allocation3]
    $region13: #{fixed_hidden_mlp.1} parent=1 // pred_fallthru
      _
    // Predicated region
    $region14: #{fixed_hidden_mlp.1} parent=1 // pred_check
      _
    $region15: #{fixed_hidden_mlp.1} parent=1 // pred_check_branch
      %306 = sbr.rel (0) target = $region17
    $region16: #{fixed_hidden_mlp.1} parent=1 // pred_region
      %307 = dma.done [#allocation3], 16
    $region17: #{fixed_hidden_mlp.1} parent=1 // pred_fallthru
      _
    %308 = vsyncpa [#allocation3], 1

</llo_original>
